<compile_context>
chip_gen: v5e
topology: v5e:2x2
jax: 0.10.0
libtpu: 0.0.40
codegen_flags: <defaults>
</compile_context>

<pallas_src>
import functools
import math

import jax
import jax.numpy as jnp
from jax.experimental import pallas as pl
from jax.experimental.pallas import tpu as pltpu

IN_DIM = 28 * 28        # 784
IN_DIM_PAD = 896        # 7 * 128  (padded contraction dim of the first matmul)
H1 = 128
H2 = 64
OUT_DIM = 10
OUT_DIM_PAD = 128       # lane-dense output block
MAX_TB = 512            # batch tile: fits comfortably in the default scoped VMEM


def _round_up(n, m):
    return ((n + m - 1) // m) * m


def mlp_kernel(x_ref, w1_ref, b1_ref, w2_ref, b2_ref, w3_ref, b3_ref, o_ref):
    # x_ref:  (TB, 896)  bf16
    # w1_ref: (896, 128) bf16    b1_ref: (1, 128) f32
    # w2_ref: (128, 64)  bf16    b2_ref: (1, 64)  f32
    # w3_ref: (64, 128)  bf16    b3_ref: (1, 128) f32
    # o_ref:  (TB, 128)  f32
    h1 = jnp.dot(x_ref[...], w1_ref[...], preferred_element_type=jnp.float32)
    h1 = jnp.maximum(h1 + b1_ref[...], 0.0).astype(jnp.bfloat16)
    h2 = jnp.dot(h1, w2_ref[...], preferred_element_type=jnp.float32)
    h2 = jnp.maximum(h2 + b2_ref[...], 0.0).astype(jnp.bfloat16)
    logits = jnp.dot(h2, w3_ref[...], preferred_element_type=jnp.float32) + b3_ref[...]
    o_ref[...] = logits.astype(o_ref.dtype)


@functools.partial(jax.jit, static_argnames=())
def mlp_forward(x_nchw, params):
    """x_nchw: (B, 1, 28, 28) float32. Returns (B, 10) float32 logits."""
    w1, b1, w2, b2, w3, b3 = params
    B = x_nchw.shape[0]
    x_flat = x_nchw.reshape(B, -1).astype(jnp.bfloat16)   # nn.Flatten: (B, 784)

    # Batch tile: small batches get a single (multiple-of-8) tile; large batches use MAX_TB.
    tb = min(MAX_TB, _round_up(B, 8))
    b_pad = _round_up(B, tb)

    # Zero-pad the batch rows and the contraction dim (zeros are exact matmul no-ops).
    x_p = jnp.zeros((b_pad, IN_DIM_PAD), jnp.bfloat16).at[:B, :IN_DIM].set(x_flat)

    # Weights: bf16, padded once. w1 rows 784->896 (matching zero input cols), w3 cols 10->128.
    w1_p = jnp.zeros((IN_DIM_PAD, H1), jnp.bfloat16).at[:IN_DIM, :].set(w1.astype(jnp.bfloat16))
    w2_b = w2.astype(jnp.bfloat16)
    w3_p = jnp.zeros((H2, OUT_DIM_PAD), jnp.bfloat16).at[:, :OUT_DIM].set(w3.astype(jnp.bfloat16))
    b1_f = b1.astype(jnp.float32)
    b2_f = b2.astype(jnp.float32)
    b3_p = jnp.zeros((1, OUT_DIM_PAD), jnp.float32).at[:, :OUT_DIM].set(b3.astype(jnp.float32))

    grid = (b_pad // tb,)

    flops = 2 * b_pad * (IN_DIM_PAD * H1 + H1 * H2 + H2 * OUT_DIM_PAD)
    bytes_accessed = (
        b_pad * IN_DIM_PAD * 2                                       # bf16 activations in
        + (IN_DIM_PAD * H1 + H1 * H2 + H2 * OUT_DIM_PAD) * 2         # bf16 weights
        + (H1 + H2 + OUT_DIM_PAD) * 4                                # f32 biases
        + b_pad * OUT_DIM_PAD * 4                                    # f32 logits out
    )

    out_p = pl.pallas_call(
        mlp_kernel,
        out_shape=jax.ShapeDtypeStruct((b_pad, OUT_DIM_PAD), jnp.float32),
        grid_spec=pltpu.PrefetchScalarGridSpec(
            num_scalar_prefetch=0,
            grid=grid,
            in_specs=[
                pl.BlockSpec((tb, IN_DIM_PAD), lambda i: (i, 0)),      # activations: tiled over batch
                pl.BlockSpec((IN_DIM_PAD, H1), lambda i: (0, 0)),      # weights/biases: VMEM-resident
                pl.BlockSpec((1, H1), lambda i: (0, 0)),
                pl.BlockSpec((H1, H2), lambda i: (0, 0)),
                pl.BlockSpec((1, H2), lambda i: (0, 0)),
                pl.BlockSpec((H2, OUT_DIM_PAD), lambda i: (0, 0)),
                pl.BlockSpec((1, OUT_DIM_PAD), lambda i: (0, 0)),
            ],
            out_specs=pl.BlockSpec((tb, OUT_DIM_PAD), lambda i: (i, 0)),
        ),
        compiler_params=pltpu.CompilerParams(
            dimension_semantics=("parallel",),
        ),
        cost_estimate=pl.CostEstimate(
            flops=flops, transcendentals=0, bytes_accessed=bytes_accessed),
    )(x_p, w1_p, b1_f, w2_b, b2_f, w3_p, b3_p)

    return out_p[:B, :OUT_DIM]


def init_params(key):
    """Deterministic init mirroring torch.nn.Linear default (uniform +/- 1/sqrt(fan_in))."""
    def linear_init(k, fan_in, fan_out):
        kw, kb = jax.random.split(k)
        bound = 1.0 / math.sqrt(fan_in)
        # Weight stored as (in, out) so the kernel does x @ W  (== PyTorch x @ W.T).
        w = jax.random.uniform(kw, (fan_in, fan_out), jnp.float32, -bound, bound)
        b = jax.random.uniform(kb, (1, fan_out), jnp.float32, -bound, bound)
        return w, b

    k1, k2, k3 = jax.random.split(key, 3)
    w1, b1 = linear_init(k1, IN_DIM, H1)
    w2, b2 = linear_init(k2, H1, H2)
    w3, b3 = linear_init(k3, H2, OUT_DIM)
    return (w1, b1, w2, b2, w3, b3)


if __name__ == "__main__":
    key = jax.random.PRNGKey(0)
    kx, kp = jax.random.split(key)

    B = 8
    x = jax.random.normal(kx, (B, 1, 28, 28), jnp.float32)   # NCHW like PyTorch
    params = init_params(kp)

    logits = mlp_forward(x, params)
    jax.block_until_ready(logits)
    assert logits.shape == (B, OUT_DIM)

    # Reference with the same bf16-in / f32-accumulate recipe.
    w1, b1, w2, b2, w3, b3 = params
    xf = x.reshape(B, -1).astype(jnp.bfloat16)
    h1 = jnp.maximum(
        jnp.dot(xf, w1.astype(jnp.bfloat16), preferred_element_type=jnp.float32) + b1, 0.0
    ).astype(jnp.bfloat16)
    h2 = jnp.maximum(
        jnp.dot(h1, w2.astype(jnp.bfloat16), preferred_element_type=jnp.float32) + b2, 0.0
    ).astype(jnp.bfloat16)
    ref = jnp.dot(h2, w3.astype(jnp.bfloat16), preferred_element_type=jnp.float32) + b3

    assert jnp.allclose(logits, ref, atol=1e-2, rtol=1e-2), (
        float(jnp.max(jnp.abs(logits - ref))))

    print("KERNEL_OK")
</pallas_src>

<mosaic_0001>
module attributes {stable_mosaic.version = 11 : i64} {
  func.func @mlp_kernel(%arg0: i32, %arg1: memref<8x896xbf16, #tpu.memory_space<vmem>>, %arg2: memref<896x128xbf16, #tpu.memory_space<vmem>>, %arg3: memref<1x128xf32, #tpu.memory_space<vmem>>, %arg4: memref<128x64xbf16, #tpu.memory_space<vmem>>, %arg5: memref<1x64xf32, #tpu.memory_space<vmem>>, %arg6: memref<64x128xbf16, #tpu.memory_space<vmem>>, %arg7: memref<1x128xf32, #tpu.memory_space<vmem>>, %arg8: memref<8x128xf32, #tpu.memory_space<vmem>>) attributes {dimension_semantics = [#tpu.dimension_semantics<parallel>], iteration_bounds = array<i64: 1>, scalar_prefetch = 0 : i64, scratch_operands = 0 : i64, tpu.core_type = #tpu.core_type<tc>, window_params = [{transform_indices = @transform_0, window_bounds = array<i64: 8, 896>}, {pipeline_mode = #tpu.pipeline_mode<synchronous>, transform_indices = @transform_1, window_bounds = array<i64: 896, 128>}, {pipeline_mode = #tpu.pipeline_mode<synchronous>, transform_indices = @transform_2, window_bounds = array<i64: 1, 128>}, {pipeline_mode = #tpu.pipeline_mode<synchronous>, transform_indices = @transform_3, window_bounds = array<i64: 128, 64>}, {pipeline_mode = #tpu.pipeline_mode<synchronous>, transform_indices = @transform_4, window_bounds = array<i64: 1, 64>}, {pipeline_mode = #tpu.pipeline_mode<synchronous>, transform_indices = @transform_5, window_bounds = array<i64: 64, 128>}, {pipeline_mode = #tpu.pipeline_mode<synchronous>, transform_indices = @transform_6, window_bounds = array<i64: 1, 128>}, {transform_indices = @transform_7, window_bounds = array<i64: 8, 128>}]} {
    %c0 = arith.constant 0 : index
    %c0_0 = arith.constant 0 : index
    %0 = vector.load %arg1[%c0, %c0_0] : memref<8x896xbf16, #tpu.memory_space<vmem>>, vector<8x896xbf16>
    %c0_1 = arith.constant 0 : index
    %c0_2 = arith.constant 0 : index
    %1 = vector.load %arg2[%c0_1, %c0_2] : memref<896x128xbf16, #tpu.memory_space<vmem>>, vector<896x128xbf16>
    %cst = arith.constant dense<0.000000e+00> : vector<8x128xf32>
    %2 = tpu.matmul %0, %1, %cst {dimension_numbers = #tpu.dot_dimension_numbers<[1], [0], [0], [1], [0, 0, 1, 1], [], []>} : vector<8x896xbf16>, vector<896x128xbf16>, vector<8x128xf32> -> vector<8x128xf32>
    %c0_3 = arith.constant 0 : index
    %c0_4 = arith.constant 0 : index
    %3 = vector.load %arg3[%c0_3, %c0_4] : memref<1x128xf32, #tpu.memory_space<vmem>>, vector<1x128xf32>
    %4 = vector.broadcast %3 : vector<1x128xf32> to vector<8x128xf32>
    %5 = arith.addf %2, %4 : vector<8x128xf32>
    %cst_5 = arith.constant 0.000000e+00 : f32
    %6 = vector.broadcast %cst_5 : f32 to vector<8x128xf32>
    %7 = arith.maximumf %5, %6 : vector<8x128xf32>
    %8 = arith.truncf %7 : vector<8x128xf32> to vector<8x128xbf16>
    %c0_6 = arith.constant 0 : index
    %c0_7 = arith.constant 0 : index
    %9 = vector.load %arg4[%c0_6, %c0_7] : memref<128x64xbf16, #tpu.memory_space<vmem>>, vector<128x64xbf16>
    %cst_8 = arith.constant dense<0.000000e+00> : vector<8x64xf32>
    %10 = tpu.matmul %8, %9, %cst_8 {dimension_numbers = #tpu.dot_dimension_numbers<[1], [0], [0], [1], [0, 0, 1, 1], [], []>} : vector<8x128xbf16>, vector<128x64xbf16>, vector<8x64xf32> -> vector<8x64xf32>
    %c0_9 = arith.constant 0 : index
    %c0_10 = arith.constant 0 : index
    %11 = vector.load %arg5[%c0_9, %c0_10] : memref<1x64xf32, #tpu.memory_space<vmem>>, vector<1x64xf32>
    %12 = vector.broadcast %11 : vector<1x64xf32> to vector<8x64xf32>
    %13 = arith.addf %10, %12 : vector<8x64xf32>
    %cst_11 = arith.constant 0.000000e+00 : f32
    %14 = vector.broadcast %cst_11 : f32 to vector<8x64xf32>
    %15 = arith.maximumf %13, %14 : vector<8x64xf32>
    %16 = arith.truncf %15 : vector<8x64xf32> to vector<8x64xbf16>
    %c0_12 = arith.constant 0 : index
    %c0_13 = arith.constant 0 : index
    %17 = vector.load %arg6[%c0_12, %c0_13] : memref<64x128xbf16, #tpu.memory_space<vmem>>, vector<64x128xbf16>
    %cst_14 = arith.constant dense<0.000000e+00> : vector<8x128xf32>
    %18 = tpu.matmul %16, %17, %cst_14 {dimension_numbers = #tpu.dot_dimension_numbers<[1], [0], [0], [1], [0, 0, 1, 1], [], []>} : vector<8x64xbf16>, vector<64x128xbf16>, vector<8x128xf32> -> vector<8x128xf32>
    %c0_15 = arith.constant 0 : index
    %c0_16 = arith.constant 0 : index
    %19 = vector.load %arg7[%c0_15, %c0_16] : memref<1x128xf32, #tpu.memory_space<vmem>>, vector<1x128xf32>
    %20 = vector.broadcast %19 : vector<1x128xf32> to vector<8x128xf32>
    %21 = arith.addf %18, %20 : vector<8x128xf32>
    %c0_17 = arith.constant 0 : index
    %c0_18 = arith.constant 0 : index
    %22 = vector.load %arg8[%c0_17, %c0_18] : memref<8x128xf32, #tpu.memory_space<vmem>>, vector<8x128xf32>
    tpu.vector_store %arg8[%c0_17, %c0_18], %21 {strides = array<i32>} : memref<8x128xf32, #tpu.memory_space<vmem>>, vector<8x128xf32>,
    return
  }
  func.func @transform_0(%arg0: i32) -> (i32, i32) {
    %c0_i32 = arith.constant 0 : i32
    %c0_i32_0 = arith.constant 0 : i32
    return %arg0, %c0_i32 : i32, i32
  }
  func.func @transform_1(%arg0: i32) -> (i32, i32) {
    %c0_i32 = arith.constant 0 : i32
    %c0_i32_0 = arith.constant 0 : i32
    %c0_i32_1 = arith.constant 0 : i32
    return %c0_i32, %c0_i32_0 : i32, i32
  }
  func.func @transform_2(%arg0: i32) -> (i32, i32) {
    %c0_i32 = arith.constant 0 : i32
    %c0_i32_0 = arith.constant 0 : i32
    %c0_i32_1 = arith.constant 0 : i32
    return %c0_i32, %c0_i32_0 : i32, i32
  }
  func.func @transform_3(%arg0: i32) -> (i32, i32) {
    %c0_i32 = arith.constant 0 : i32
    %c0_i32_0 = arith.constant 0 : i32
    %c0_i32_1 = arith.constant 0 : i32
    return %c0_i32, %c0_i32_0 : i32, i32
  }
  func.func @transform_4(%arg0: i32) -> (i32, i32) {
    %c0_i32 = arith.constant 0 : i32
    %c0_i32_0 = arith.constant 0 : i32
    %c0_i32_1 = arith.constant 0 : i32
    return %c0_i32, %c0_i32_0 : i32, i32
  }
  func.func @transform_5(%arg0: i32) -> (i32, i32) {
    %c0_i32 = arith.constant 0 : i32
    %c0_i32_0 = arith.constant 0 : i32
    %c0_i32_1 = arith.constant 0 : i32
    return %c0_i32, %c0_i32_0 : i32, i32
  }
  func.func @transform_6(%arg0: i32) -> (i32, i32) {
    %c0_i32 = arith.constant 0 : i32
    %c0_i32_0 = arith.constant 0 : i32
    %c0_i32_1 = arith.constant 0 : i32
    return %c0_i32, %c0_i32_0 : i32, i32
  }
  func.func @transform_7(%arg0: i32) -> (i32, i32) {
    %c0_i32 = arith.constant 0 : i32
    %c0_i32_0 = arith.constant 0 : i32
    return %arg0, %c0_i32 : i32, i32
  }
}

</mosaic_0001>

<llo_original>
// kernel: mlp_forward.1
$region0: #{mlp_forward.1}
  #allocation0 [shape = 'u32[]', space=smem, size = 0x4, offset = 0x4, fixed_abs, tag = 'smem constant byte address 0x4 - core index']
  #allocation1 [shape = 'u32[72,128]{1,0:T(1,128)}', space=vmem, size = 0x9000, scoped, tag = 'internal scratch']
  %s0 = inlined_call_operand.vmem [shape: bf16[8,896], index: 0, kind: input, shape index: {}]
  %s1 = inlined_call_operand.vmem [shape: bf16[896,128], index: 1, kind: input, shape index: {}]
  %s2 = inlined_call_operand.vmem [shape: f32[1,128], index: 2, kind: input, shape index: {}]
  %s3 = inlined_call_operand.vmem [shape: bf16[128,64], index: 3, kind: input, shape index: {}]
  %s4 = inlined_call_operand.vmem [shape: f32[1,64], index: 4, kind: input, shape index: {}]
  %s5 = inlined_call_operand.vmem [shape: bf16[64,128], index: 5, kind: input, shape index: {}]
  %s6 = inlined_call_operand.vmem [shape: f32[1,128], index: 6, kind: input, shape index: {}]
  %s7 = inlined_call_operand.hbm [shape: f32[8,128], index: 7, kind: output, shape index: {}]
  %s8 = sld [smem:[#allocation0]]
  $region38: #{mlp_forward.1} parent=0
    _
  %s10 = ssub.s32 1, %s8
  %s11 = scalar_select 0, %s10, %s8
  $region1: #{mlp_forward.1} parent=0
    #allocation2 [shape = 'u8[4096]{0}', space=vmem, size = 0x1000, scoped, tag = 'output window, operand 0, single buffered']
    #allocation3 [shape = 's32[1]{0}', space=sflag, size = 0x4, scoped, tag = 'scoped memory for mlp_forward.1']
    %12 = vsyncpa [#allocation3], 0
    // Predicated region
    $region2: #{mlp_forward.1} parent=1 // pred_check
      _
    $region3: #{mlp_forward.1} parent=1 // pred_check_branch
      %14 = sbr.rel (0) target = $region5
    $region4: #{mlp_forward.1} parent=1 // pred_region
      _
    $region5: #{mlp_forward.1} parent=1 // pred_fallthru
      _
    // Predicated region
    $region6: #{mlp_forward.1} parent=1 // pred_check
      _
    $region7: #{mlp_forward.1} parent=1 // pred_check_branch
      %16 = sbr.rel (0) target = $region9
    $region8: #{mlp_forward.1} parent=1 // pred_region
      _
    $region9: #{mlp_forward.1} parent=1 // pred_fallthru
      _
    // Predicated region
    $region10: #{mlp_forward.1} parent=1 // pred_check
      _
    $region11: #{mlp_forward.1} parent=1 // pred_check_branch
      %18 = sbr.rel (0) target = $region13
    $region12: #{mlp_forward.1} parent=1 // pred_region
      _
    $region13: #{mlp_forward.1} parent=1 // pred_fallthru
      _
    // Predicated region
    $region14: #{mlp_forward.1} parent=1 // pred_check
      _
    $region15: #{mlp_forward.1} parent=1 // pred_check_branch
      %20 = sbr.rel (0) target = $region17
    $region16: #{mlp_forward.1} parent=1 // pred_region
      _
    $region17: #{mlp_forward.1} parent=1 // pred_fallthru
      _
    // Predicated region
    $region18: #{mlp_forward.1} parent=1 // pred_check
      _
    $region19: #{mlp_forward.1} parent=1 // pred_check_branch
      %22 = sbr.rel (0) target = $region21
    $region20: #{mlp_forward.1} parent=1 // pred_region
      _
    $region21: #{mlp_forward.1} parent=1 // pred_fallthru
      _
    // Predicated region
    $region22: #{mlp_forward.1} parent=1 // pred_check
      _
    $region23: #{mlp_forward.1} parent=1 // pred_check_branch
      %24 = sbr.rel (0) target = $region25
    $region24: #{mlp_forward.1} parent=1 // pred_region
      _
    $region25: #{mlp_forward.1} parent=1 // pred_fallthru
      _
    // Predicated region
    $region26: #{mlp_forward.1} parent=1 // pred_check
      _
    $region27: #{mlp_forward.1} parent=1 // pred_check_branch
      %26 = sbr.rel (0) target = $region29
    $region28: #{mlp_forward.1} parent=1 // pred_region
      _
    $region29: #{mlp_forward.1} parent=1 // pred_fallthru
      _
    %v28 = vld [vmem:[%s0] sm:$0xff]
    %v29 = vld [vmem:[%s0 + $0x8] sm:$0xff]
    %v30 = vld [vmem:[%s0 + $0x10] sm:$0xff]
    %v31 = vld [vmem:[%s0 + $0x18] sm:$0xf]
    %v32 = vld [vmem:[%s1] sm:$0xf]
    %v33 = vld [vmem:[%s1 + $0x4] sm:$0xf]
    %v34 = vld [vmem:[%s1 + $0x8] sm:$0xf]
    %v35 = vld [vmem:[%s1 + $0xc] sm:$0xf]
    %v36 = vld [vmem:[%s1 + $0x10] sm:$0xf]
    %v37 = vld [vmem:[%s1 + $0x14] sm:$0xf]
    %v38 = vld [vmem:[%s1 + $0x18] sm:$0xf]
    %v39 = vld [vmem:[%s1 + $0x1c] sm:$0xf]
    %v40 = vld [vmem:[%s1 + $0x20] sm:$0xf]
    %v41 = vld [vmem:[%s1 + $0x24] sm:$0xf]
    %v42 = vld [vmem:[%s1 + $0x28] sm:$0xf]
    %v43 = vld [vmem:[%s1 + $0x2c] sm:$0xf]
    %v44 = vld [vmem:[%s1 + $0x30] sm:$0xf]
    %v45 = vld [vmem:[%s1 + $0x34] sm:$0xf]
    %v46 = vld [vmem:[%s1 + $0x38] sm:$0xf]
    %v47 = vld [vmem:[%s1 + $0x3c] sm:$0xf]
    %v48 = vld [vmem:[%s1 + $0x40] sm:$0xf]
    %v49 = vld [vmem:[%s1 + $0x44] sm:$0xf]
    %v50 = vld [vmem:[%s1 + $0x48] sm:$0xf]
    %v51 = vld [vmem:[%s1 + $0x4c] sm:$0xf]
    %v52 = vld [vmem:[%s1 + $0x50] sm:$0xf]
    %v53 = vld [vmem:[%s1 + $0x54] sm:$0xf]
    %v54 = vld [vmem:[%s1 + $0x58] sm:$0xf]
    %v55 = vld [vmem:[%s1 + $0x5c] sm:$0xf]
    %v56 = vld [vmem:[%s1 + $0x60] sm:$0xf]
    %v57 = vld [vmem:[%s1 + $0x64] sm:$0xf]
    %v58 = vld [vmem:[%s1 + $0x68] sm:$0xf]
    %v59 = vld [vmem:[%s1 + $0x6c] sm:$0xf]
    %v60 = vld [vmem:[%s1 + $0x70] sm:$0xf]
    %v61 = vld [vmem:[%s1 + $0x74] sm:$0xf]
    %v62 = vld [vmem:[%s1 + $0x78] sm:$0xf]
    %v63 = vld [vmem:[%s1 + $0x7c] sm:$0xf]
    %v64 = vld [vmem:[%s1 + $0x80] sm:$0xf]
    %v65 = vld [vmem:[%s1 + $0x84] sm:$0xf]
    %v66 = vld [vmem:[%s1 + $0x88] sm:$0xf]
    %v67 = vld [vmem:[%s1 + $0x8c] sm:$0xf]
    %v68 = vld [vmem:[%s1 + $0x90] sm:$0xf]
    %v69 = vld [vmem:[%s1 + $0x94] sm:$0xf]
    %v70 = vld [vmem:[%s1 + $0x98] sm:$0xf]
    %v71 = vld [vmem:[%s1 + $0x9c] sm:$0xf]
    %v72 = vld [vmem:[%s1 + $0xa0] sm:$0xf]
    %v73 = vld [vmem:[%s1 + $0xa4] sm:$0xf]
    %v74 = vld [vmem:[%s1 + $0xa8] sm:$0xf]
    %v75 = vld [vmem:[%s1 + $0xac] sm:$0xf]
    %v76 = vld [vmem:[%s1 + $0xb0] sm:$0xf]
    %v77 = vld [vmem:[%s1 + $0xb4] sm:$0xf]
    %v78 = vld [vmem:[%s1 + $0xb8] sm:$0xf]
    %v79 = vld [vmem:[%s1 + $0xbc] sm:$0xf]
    %v80 = vld [vmem:[%s1 + $0xc0] sm:$0xf]
    %v81 = vld [vmem:[%s1 + $0xc4] sm:$0xf]
    %v82 = vld [vmem:[%s1 + $0xc8] sm:$0xf]
    %v83 = vld [vmem:[%s1 + $0xcc] sm:$0xf]
    %v84 = vld [vmem:[%s1 + $0xd0] sm:$0xf]
    %v85 = vld [vmem:[%s1 + $0xd4] sm:$0xf]
    %v86 = vld [vmem:[%s1 + $0xd8] sm:$0xf]
    %v87 = vld [vmem:[%s1 + $0xdc] sm:$0xf]
    %v88 = vld [vmem:[%s1 + $0xe0] sm:$0xf]
    %v89 = vld [vmem:[%s1 + $0xe4] sm:$0xf]
    %v90 = vld [vmem:[%s1 + $0xe8] sm:$0xf]
    %v91 = vld [vmem:[%s1 + $0xec] sm:$0xf]
    %v92 = vld [vmem:[%s1 + $0xf0] sm:$0xf]
    %v93 = vld [vmem:[%s1 + $0xf4] sm:$0xf]
    %v94 = vld [vmem:[%s1 + $0xf8] sm:$0xf]
    %v95 = vld [vmem:[%s1 + $0xfc] sm:$0xf]
    %v96 = vld [vmem:[%s1 + $0x100] sm:$0xf]
    %v97 = vld [vmem:[%s1 + $0x104] sm:$0xf]
    %v98 = vld [vmem:[%s1 + $0x108] sm:$0xf]
    %v99 = vld [vmem:[%s1 + $0x10c] sm:$0xf]
    %v100 = vld [vmem:[%s1 + $0x110] sm:$0xf]
    %v101 = vld [vmem:[%s1 + $0x114] sm:$0xf]
    %v102 = vld [vmem:[%s1 + $0x118] sm:$0xf]
    %v103 = vld [vmem:[%s1 + $0x11c] sm:$0xf]
    %v104 = vld [vmem:[%s1 + $0x120] sm:$0xf]
    %v105 = vld [vmem:[%s1 + $0x124] sm:$0xf]
    %v106 = vld [vmem:[%s1 + $0x128] sm:$0xf]
    %v107 = vld [vmem:[%s1 + $0x12c] sm:$0xf]
    %v108 = vld [vmem:[%s1 + $0x130] sm:$0xf]
    %v109 = vld [vmem:[%s1 + $0x134] sm:$0xf]
    %v110 = vld [vmem:[%s1 + $0x138] sm:$0xf]
    %v111 = vld [vmem:[%s1 + $0x13c] sm:$0xf]
    %v112 = vld [vmem:[%s1 + $0x140] sm:$0xf]
    %v113 = vld [vmem:[%s1 + $0x144] sm:$0xf]
    %v114 = vld [vmem:[%s1 + $0x148] sm:$0xf]
    %v115 = vld [vmem:[%s1 + $0x14c] sm:$0xf]
    %v116 = vld [vmem:[%s1 + $0x150] sm:$0xf]
    %v117 = vld [vmem:[%s1 + $0x154] sm:$0xf]
    %v118 = vld [vmem:[%s1 + $0x158] sm:$0xf]
    %v119 = vld [vmem:[%s1 + $0x15c] sm:$0xf]
    %v120 = vld [vmem:[%s1 + $0x160] sm:$0xf]
    %v121 = vld [vmem:[%s1 + $0x164] sm:$0xf]
    %v122 = vld [vmem:[%s1 + $0x168] sm:$0xf]
    %v123 = vld [vmem:[%s1 + $0x16c] sm:$0xf]
    %v124 = vld [vmem:[%s1 + $0x170] sm:$0xf]
    %v125 = vld [vmem:[%s1 + $0x174] sm:$0xf]
    %v126 = vld [vmem:[%s1 + $0x178] sm:$0xf]
    %v127 = vld [vmem:[%s1 + $0x17c] sm:$0xf]
    %v128 = vld [vmem:[%s1 + $0x180] sm:$0xf]
    %v129 = vld [vmem:[%s1 + $0x184] sm:$0xf]
    %v130 = vld [vmem:[%s1 + $0x188] sm:$0xf]
    %v131 = vld [vmem:[%s1 + $0x18c] sm:$0xf]
    %v132 = vld [vmem:[%s1 + $0x190] sm:$0xf]
    %v133 = vld [vmem:[%s1 + $0x194] sm:$0xf]
    %v134 = vld [vmem:[%s1 + $0x198] sm:$0xf]
    %v135 = vld [vmem:[%s1 + $0x19c] sm:$0xf]
    %v136 = vld [vmem:[%s1 + $0x1a0] sm:$0xf]
    %v137 = vld [vmem:[%s1 + $0x1a4] sm:$0xf]
    %v138 = vld [vmem:[%s1 + $0x1a8] sm:$0xf]
    %v139 = vld [vmem:[%s1 + $0x1ac] sm:$0xf]
    %v140 = vld [vmem:[%s1 + $0x1b0] sm:$0xf]
    %v141 = vld [vmem:[%s1 + $0x1b4] sm:$0xf]
    %v142 = vld [vmem:[%s1 + $0x1b8] sm:$0xf]
    %v143 = vld [vmem:[%s1 + $0x1bc] sm:$0xf]
    %v144 = vld [vmem:[%s2] sm:$0x1]
    %v146 = vperm.slane %v144, 0
    %v152 = vunpack.c.l.b16 %v28
    %v153 = vunpack.c.h.b16 %v28
    %v154 = vunpack.c.l.b16 %v29
    %v155 = vunpack.c.h.b16 %v29
    %v156 = vunpack.c.l.b16 %v30
    %v157 = vunpack.c.h.b16 %v30
    %v158 = vunpack.c.l.b16 %v31
    %v159 = vpack.c.b16 %v152, %v152
    %v160 = vpack.c.b16 %v153, %v153
    %v161 = vpack.c.b16 %v154, %v154
    %v162 = vpack.c.b16 %v155, %v155
    %v163 = vpack.c.b16 %v156, %v156
    %v164 = vpack.c.b16 %v157, %v157
    %v165 = vpack.c.b16 %v158, %v158
    %v285 = vunpack.c.l.b16 %v32
    %v286 = vunpack.c.l.b16 %v33
    %v287 = vunpack.c.l.b16 %v34
    %v288 = vunpack.c.l.b16 %v35
    %v289 = vunpack.c.l.b16 %v36
    %v290 = vunpack.c.l.b16 %v37
    %v291 = vunpack.c.l.b16 %v38
    %v292 = vunpack.c.l.b16 %v39
    %v293 = vunpack.c.l.b16 %v40
    %v294 = vunpack.c.l.b16 %v41
    %v295 = vunpack.c.l.b16 %v42
    %v296 = vunpack.c.l.b16 %v43
    %v297 = vunpack.c.l.b16 %v44
    %v298 = vunpack.c.l.b16 %v45
    %v299 = vunpack.c.l.b16 %v46
    %v300 = vunpack.c.l.b16 %v47
    %v301 = vunpack.c.l.b16 %v48
    %v302 = vunpack.c.l.b16 %v49
    %v303 = vunpack.c.l.b16 %v50
    %v304 = vunpack.c.l.b16 %v51
    %v305 = vunpack.c.l.b16 %v52
    %v306 = vunpack.c.l.b16 %v53
    %v307 = vunpack.c.l.b16 %v54
    %v308 = vunpack.c.l.b16 %v55
    %v309 = vunpack.c.l.b16 %v56
    %v310 = vunpack.c.l.b16 %v57
    %v311 = vunpack.c.l.b16 %v58
    %v312 = vunpack.c.l.b16 %v59
    %v313 = vunpack.c.l.b16 %v60
    %v314 = vunpack.c.l.b16 %v61
    %v315 = vunpack.c.l.b16 %v62
    %v316 = vunpack.c.l.b16 %v63
    %v317 = vunpack.c.l.b16 %v64
    %v318 = vunpack.c.l.b16 %v65
    %v319 = vunpack.c.l.b16 %v66
    %v320 = vunpack.c.l.b16 %v67
    %v321 = vunpack.c.l.b16 %v68
    %v322 = vunpack.c.l.b16 %v69
    %v323 = vunpack.c.l.b16 %v70
    %v324 = vunpack.c.l.b16 %v71
    %v325 = vunpack.c.l.b16 %v72
    %v326 = vunpack.c.l.b16 %v73
    %v327 = vunpack.c.l.b16 %v74
    %v328 = vunpack.c.l.b16 %v75
    %v329 = vunpack.c.l.b16 %v76
    %v330 = vunpack.c.l.b16 %v77
    %v331 = vunpack.c.l.b16 %v78
    %v332 = vunpack.c.l.b16 %v79
    %v333 = vunpack.c.l.b16 %v80
    %v334 = vunpack.c.l.b16 %v81
    %v335 = vunpack.c.l.b16 %v82
    %v336 = vunpack.c.l.b16 %v83
    %v337 = vunpack.c.l.b16 %v84
    %v338 = vunpack.c.l.b16 %v85
    %v339 = vunpack.c.l.b16 %v86
    %v340 = vunpack.c.l.b16 %v87
    %v341 = vunpack.c.l.b16 %v88
    %v342 = vunpack.c.l.b16 %v89
    %v343 = vunpack.c.l.b16 %v90
    %v344 = vunpack.c.l.b16 %v91
    %v345 = vunpack.c.l.b16 %v92
    %v346 = vunpack.c.l.b16 %v93
    %v347 = vunpack.c.l.b16 %v94
    %v348 = vunpack.c.l.b16 %v95
    %v349 = vunpack.c.l.b16 %v96
    %v350 = vunpack.c.l.b16 %v97
    %v351 = vunpack.c.l.b16 %v98
    %v352 = vunpack.c.l.b16 %v99
    %v353 = vunpack.c.l.b16 %v100
    %v354 = vunpack.c.l.b16 %v101
    %v355 = vunpack.c.l.b16 %v102
    %v356 = vunpack.c.l.b16 %v103
    %v357 = vunpack.c.l.b16 %v104
    %v358 = vunpack.c.l.b16 %v105
    %v359 = vunpack.c.l.b16 %v106
    %v360 = vunpack.c.l.b16 %v107
    %v361 = vunpack.c.l.b16 %v108
    %v362 = vunpack.c.l.b16 %v109
    %v363 = vunpack.c.l.b16 %v110
    %v364 = vunpack.c.l.b16 %v111
    %v365 = vunpack.c.l.b16 %v112
    %v366 = vunpack.c.l.b16 %v113
    %v367 = vunpack.c.l.b16 %v114
    %v368 = vunpack.c.l.b16 %v115
    %v369 = vunpack.c.l.b16 %v116
    %v370 = vunpack.c.l.b16 %v117
    %v371 = vunpack.c.l.b16 %v118
    %v372 = vunpack.c.l.b16 %v119
    %v373 = vunpack.c.l.b16 %v120
    %v374 = vunpack.c.l.b16 %v121
    %v375 = vunpack.c.l.b16 %v122
    %v376 = vunpack.c.l.b16 %v123
    %v377 = vunpack.c.l.b16 %v124
    %v378 = vunpack.c.l.b16 %v125
    %v379 = vunpack.c.l.b16 %v126
    %v380 = vunpack.c.l.b16 %v127
    %v381 = vunpack.c.l.b16 %v128
    %v382 = vunpack.c.l.b16 %v129
    %v383 = vunpack.c.l.b16 %v130
    %v384 = vunpack.c.l.b16 %v131
    %v385 = vunpack.c.l.b16 %v132
    %v386 = vunpack.c.l.b16 %v133
    %v387 = vunpack.c.l.b16 %v134
    %v388 = vunpack.c.l.b16 %v135
    %v389 = vunpack.c.l.b16 %v136
    %v390 = vunpack.c.l.b16 %v137
    %v391 = vunpack.c.l.b16 %v138
    %v392 = vunpack.c.l.b16 %v139
    %v393 = vunpack.c.l.b16 %v140
    %v394 = vunpack.c.l.b16 %v141
    %v395 = vunpack.c.l.b16 %v142
    %v396 = vunpack.c.l.b16 %v143
    %v397 = vpack.c.b16 %v286, %v285
    %v398 = vpack.c.b16 %v288, %v287
    %v399 = vpack.c.b16 %v290, %v289
    %v400 = vpack.c.b16 %v292, %v291
    %v401 = vpack.c.b16 %v294, %v293
    %v402 = vpack.c.b16 %v296, %v295
    %v403 = vpack.c.b16 %v298, %v297
    %v404 = vpack.c.b16 %v300, %v299
    %v405 = vpack.c.b16 %v302, %v301
    %v406 = vpack.c.b16 %v304, %v303
    %v407 = vpack.c.b16 %v306, %v305
    %v408 = vpack.c.b16 %v308, %v307
    %v409 = vpack.c.b16 %v310, %v309
    %v410 = vpack.c.b16 %v312, %v311
    %v411 = vpack.c.b16 %v314, %v313
    %v412 = vpack.c.b16 %v316, %v315
    %v413 = vpack.c.b16 %v318, %v317
    %v414 = vpack.c.b16 %v320, %v319
    %v415 = vpack.c.b16 %v322, %v321
    %v416 = vpack.c.b16 %v324, %v323
    %v417 = vpack.c.b16 %v326, %v325
    %v418 = vpack.c.b16 %v328, %v327
    %v419 = vpack.c.b16 %v330, %v329
    %v420 = vpack.c.b16 %v332, %v331
    %v421 = vpack.c.b16 %v334, %v333
    %v422 = vpack.c.b16 %v336, %v335
    %v423 = vpack.c.b16 %v338, %v337
    %v424 = vpack.c.b16 %v340, %v339
    %v425 = vpack.c.b16 %v342, %v341
    %v426 = vpack.c.b16 %v344, %v343
    %v427 = vpack.c.b16 %v346, %v345
    %v428 = vpack.c.b16 %v348, %v347
    %v429 = vpack.c.b16 %v350, %v349
    %v430 = vpack.c.b16 %v352, %v351
    %v431 = vpack.c.b16 %v354, %v353
    %v432 = vpack.c.b16 %v356, %v355
    %v433 = vpack.c.b16 %v358, %v357
    %v434 = vpack.c.b16 %v360, %v359
    %v435 = vpack.c.b16 %v362, %v361
    %v436 = vpack.c.b16 %v364, %v363
    %v437 = vpack.c.b16 %v366, %v365
    %v438 = vpack.c.b16 %v368, %v367
    %v439 = vpack.c.b16 %v370, %v369
    %v440 = vpack.c.b16 %v372, %v371
    %v441 = vpack.c.b16 %v374, %v373
    %v442 = vpack.c.b16 %v376, %v375
    %v443 = vpack.c.b16 %v378, %v377
    %v444 = vpack.c.b16 %v380, %v379
    %v445 = vpack.c.b16 %v382, %v381
    %v446 = vpack.c.b16 %v384, %v383
    %v447 = vpack.c.b16 %v386, %v385
    %v448 = vpack.c.b16 %v388, %v387
    %v449 = vpack.c.b16 %v390, %v389
    %v450 = vpack.c.b16 %v392, %v391
    %v451 = vpack.c.b16 %v394, %v393
    %v452 = vpack.c.b16 %v396, %v395
    %509 = vmatpush.bf16.msra.mxu0 %v404
    %510 = vmatpush.bf16.msra.mxu0 %v403
    %511 = vmatpush.bf16.msra.mxu0 %v402
    %512 = vmatpush.bf16.msra.mxu0 %v401
    %513 = vmatpush.bf16.msra.mxu0 %v400
    %514 = vmatpush.bf16.msra.mxu0 %v399
    %515 = vmatpush.bf16.msra.mxu0 %v398
    %516 = vmatpush.bf16.msra.mxu0 %v397
    %517 = vmatmul.bf16.gmra.mxu0 %v159
    %v518 = vpop.f32.mrf.mxu0
    %v519 = vadd.f32 %v146, %v518
    %v520 = vpop.f32.mrf.mxu0
    %521 = vdwg.mxu0
    %522 = vmatpush.bf16.msra.mxu0 %v412
    %523 = vmatpush.bf16.msra.mxu0 %v411
    %524 = vmatpush.bf16.msra.mxu0 %v410
    %525 = vmatpush.bf16.msra.mxu0 %v409
    %526 = vmatpush.bf16.msra.mxu0 %v408
    %527 = vmatpush.bf16.msra.mxu0 %v407
    %528 = vmatpush.bf16.msra.mxu0 %v406
    %529 = vmatpush.bf16.msra.mxu0 %v405
    %530 = vmatmul.bf16.gmra.mxu0 %v160
    %v531 = vpop.f32.mrf.mxu0
    %v532 = vadd.f32 %v519, %v531
    %v533 = vpop.f32.mrf.mxu0
    %534 = vdwg.mxu0
    %535 = vmatpush.bf16.msra.mxu0 %v420
    %536 = vmatpush.bf16.msra.mxu0 %v419
    %537 = vmatpush.bf16.msra.mxu0 %v418
    %538 = vmatpush.bf16.msra.mxu0 %v417
    %539 = vmatpush.bf16.msra.mxu0 %v416
    %540 = vmatpush.bf16.msra.mxu0 %v415
    %541 = vmatpush.bf16.msra.mxu0 %v414
    %542 = vmatpush.bf16.msra.mxu0 %v413
    %543 = vmatmul.bf16.gmra.mxu0 %v161
    %v544 = vpop.f32.mrf.mxu0
    %v545 = vadd.f32 %v532, %v544
    %v546 = vpop.f32.mrf.mxu0
    %547 = vdwg.mxu0
    %548 = vmatpush.bf16.msra.mxu0 %v428
    %549 = vmatpush.bf16.msra.mxu0 %v427
    %550 = vmatpush.bf16.msra.mxu0 %v426
    %551 = vmatpush.bf16.msra.mxu0 %v425
    %552 = vmatpush.bf16.msra.mxu0 %v424
    %553 = vmatpush.bf16.msra.mxu0 %v423
    %554 = vmatpush.bf16.msra.mxu0 %v422
    %555 = vmatpush.bf16.msra.mxu0 %v421
    %556 = vmatmul.bf16.gmra.mxu0 %v162
    %v557 = vpop.f32.mrf.mxu0
    %v558 = vadd.f32 %v545, %v557
    %v559 = vpop.f32.mrf.mxu0
    %560 = vdwg.mxu0
    %561 = vmatpush.bf16.msra.mxu0 %v436
    %562 = vmatpush.bf16.msra.mxu0 %v435
    %563 = vmatpush.bf16.msra.mxu0 %v434
    %564 = vmatpush.bf16.msra.mxu0 %v433
    %565 = vmatpush.bf16.msra.mxu0 %v432
    %566 = vmatpush.bf16.msra.mxu0 %v431
    %567 = vmatpush.bf16.msra.mxu0 %v430
    %568 = vmatpush.bf16.msra.mxu0 %v429
    %569 = vmatmul.bf16.gmra.mxu0 %v163
    %v570 = vpop.f32.mrf.mxu0
    %v571 = vadd.f32 %v558, %v570
    %v572 = vpop.f32.mrf.mxu0
    %573 = vdwg.mxu0
    %574 = vmatpush.bf16.msra.mxu0 %v444
    %575 = vmatpush.bf16.msra.mxu0 %v443
    %576 = vmatpush.bf16.msra.mxu0 %v442
    %577 = vmatpush.bf16.msra.mxu0 %v441
    %578 = vmatpush.bf16.msra.mxu0 %v440
    %579 = vmatpush.bf16.msra.mxu0 %v439
    %580 = vmatpush.bf16.msra.mxu0 %v438
    %581 = vmatpush.bf16.msra.mxu0 %v437
    %582 = vmatmul.bf16.gmra.mxu0 %v164
    %v583 = vpop.f32.mrf.mxu0
    %v584 = vadd.f32 %v571, %v583
    %v585 = vpop.f32.mrf.mxu0
    %586 = vdwg.mxu0
    %587 = vmatpush.bf16.msra.mxu0 %v452
    %588 = vmatpush.bf16.msra.mxu0 %v451
    %589 = vmatpush.bf16.msra.mxu0 %v450
    %590 = vmatpush.bf16.msra.mxu0 %v449
    %591 = vmatpush.bf16.msra.mxu0 %v448
    %592 = vmatpush.bf16.msra.mxu0 %v447
    %593 = vmatpush.bf16.msra.mxu0 %v446
    %594 = vmatpush.bf16.msra.mxu0 %v445
    %595 = vmatmul.bf16.gmra.mxu0 %v165
    %v596 = vpop.f32.mrf.mxu0
    %v597 = vadd.f32 %v584, %v596
    %v598 = vpop.f32.mrf.mxu0
    %599 = vdwg.mxu0
    %v600 = vmax.f32 %v597, 0.0
    %v601 = vpack.c.bf16 %v600, %v600
    %v602 = vld [vmem:[%s3] sm:$0xf]
    %v603 = vld [vmem:[%s3 + $0x4] sm:$0xf]
    %v604 = vld [vmem:[%s3 + $0x8] sm:$0xf]
    %v605 = vld [vmem:[%s3 + $0xc] sm:$0xf]
    %v606 = vld [vmem:[%s3 + $0x10] sm:$0xf]
    %v607 = vld [vmem:[%s3 + $0x14] sm:$0xf]
    %v608 = vld [vmem:[%s3 + $0x18] sm:$0xf]
    %v609 = vld [vmem:[%s3 + $0x1c] sm:$0xf]
    %v610 = vld [vmem:[%s3 + $0x20] sm:$0xf]
    %v611 = vld [vmem:[%s3 + $0x24] sm:$0xf]
    %v612 = vld [vmem:[%s3 + $0x28] sm:$0xf]
    %v613 = vld [vmem:[%s3 + $0x2c] sm:$0xf]
    %v614 = vld [vmem:[%s3 + $0x30] sm:$0xf]
    %v615 = vld [vmem:[%s3 + $0x34] sm:$0xf]
    %v616 = vld [vmem:[%s3 + $0x38] sm:$0xf]
    %v617 = vld [vmem:[%s3 + $0x3c] sm:$0xf]
    %v618 = vld [vmem:[%s4] sm:$0x1]
    %v620 = vperm.slane %v618, 0
    %v638 = vunpack.c.l.b16 %v602
    %v639 = vunpack.c.l.b16 %v603
    %v640 = vunpack.c.l.b16 %v604
    %v641 = vunpack.c.l.b16 %v605
    %v642 = vunpack.c.l.b16 %v606
    %v643 = vunpack.c.l.b16 %v607
    %v644 = vunpack.c.l.b16 %v608
    %v645 = vunpack.c.l.b16 %v609
    %v646 = vunpack.c.l.b16 %v610
    %v647 = vunpack.c.l.b16 %v611
    %v648 = vunpack.c.l.b16 %v612
    %v649 = vunpack.c.l.b16 %v613
    %v650 = vunpack.c.l.b16 %v614
    %v651 = vunpack.c.l.b16 %v615
    %v652 = vunpack.c.l.b16 %v616
    %v653 = vunpack.c.l.b16 %v617
    %v654 = vpack.c.b16 %v639, %v638
    %v655 = vpack.c.b16 %v641, %v640
    %v656 = vpack.c.b16 %v643, %v642
    %v657 = vpack.c.b16 %v645, %v644
    %v658 = vpack.c.b16 %v647, %v646
    %v659 = vpack.c.b16 %v649, %v648
    %v660 = vpack.c.b16 %v651, %v650
    %v661 = vpack.c.b16 %v653, %v652
    %670 = vmatpush.bf16.msra.mxu0 %v661
    %671 = vmatpush.bf16.msra.mxu0 %v660
    %672 = vmatpush.bf16.msra.mxu0 %v659
    %673 = vmatpush.bf16.msra.mxu0 %v658
    %674 = vmatpush.bf16.msra.mxu0 %v657
    %675 = vmatpush.bf16.msra.mxu0 %v656
    %676 = vmatpush.bf16.msra.mxu0 %v655
    %677 = vmatpush.bf16.msra.mxu0 %v654
    %678 = vmatmul.bf16.gmra.mxu0 %v601
    %v679 = vpop.f32.mrf.mxu0
    %v680 = vadd.f32 %v620, %v679
    %v681 = vpop.f32.mrf.mxu0
    %682 = vdwg.mxu0
    %v683 = vmax.f32 %v680, 0.0
    %v684 = vpack.c.bf16 %v683, %v683
    %v685 = vld [vmem:[%s5] sm:$0xf]
    %v686 = vld [vmem:[%s5 + $0x4] sm:$0xf]
    %v687 = vld [vmem:[%s5 + $0x8] sm:$0xf]
    %v688 = vld [vmem:[%s5 + $0xc] sm:$0xf]
    %v689 = vld [vmem:[%s5 + $0x10] sm:$0xf]
    %v690 = vld [vmem:[%s5 + $0x14] sm:$0xf]
    %v691 = vld [vmem:[%s5 + $0x18] sm:$0xf]
    %v692 = vld [vmem:[%s5 + $0x1c] sm:$0xf]
    %v693 = vld [vmem:[%s6] sm:$0x1]
    %v695 = vperm.slane %v693, 0
    %v705 = vunpack.c.l.b16 %v685
    %v706 = vunpack.c.l.b16 %v686
    %v707 = vunpack.c.l.b16 %v687
    %v708 = vunpack.c.l.b16 %v688
    %v709 = vunpack.c.l.b16 %v689
    %v710 = vunpack.c.l.b16 %v690
    %v711 = vunpack.c.l.b16 %v691
    %v712 = vunpack.c.l.b16 %v692
    %v713 = vpack.c.b16 %v706, %v705
    %v714 = vpack.c.b16 %v708, %v707
    %v715 = vpack.c.b16 %v710, %v709
    %v716 = vpack.c.b16 %v712, %v711
    %vm721 = vcmask 523264
    %v723 = vsel %vm721, %v684, 0
    %725 = vmatpush.bf16.msra.mxu0 0
    %726 = vmatpush.bf16.msra.mxu0 0
    %727 = vmatpush.bf16.msra.mxu0 0
    %728 = vmatpush.bf16.msra.mxu0 0
    %729 = vmatpush.bf16.msra.mxu0 %v716
    %730 = vmatpush.bf16.msra.mxu0 %v715
    %731 = vmatpush.bf16.msra.mxu0 %v714
    %732 = vmatpush.bf16.msra.mxu0 %v713
    %733 = vmatmul.bf16.gmra.mxu0 %v723
    %v734 = vpop.f32.mrf.mxu0
    %v735 = vadd.f32 %v695, %v734
    %v736 = vpop.f32.mrf.mxu0
    %737 = vdwg.mxu0
    %738 = vst [vmem:[#allocation2] sm:$0xff] %v735
    // Predicated region
    $region30: #{mlp_forward.1} parent=1 // pred_check
      _
    $region31: #{mlp_forward.1} parent=1 // pred_check_branch
      %740 = sbr.rel (0) target = $region33
    $region32: #{mlp_forward.1} parent=1 // pred_region
      %742 = vsyncadd [#allocation3], 0
      %s744 = sshll.u32 [#allocation2], 4
      %s745 = int_to_ptr.vmem [resolvable:$true] %s744
      %s746 = sshll.u32 %s7, 4
      %s747 = int_to_ptr.hbm [resolvable:$true] %s746
      %749 = dma.vmem_to_hbm [thread:$0]  %s745, 128, %s747, [#allocation3]
    $region33: #{mlp_forward.1} parent=1 // pred_fallthru
      _
    // Predicated region
    $region34: #{mlp_forward.1} parent=1 // pred_check
      _
    $region35: #{mlp_forward.1} parent=1 // pred_check_branch
      %751 = sbr.rel (0) target = $region37
    $region36: #{mlp_forward.1} parent=1 // pred_region
      %753 = dma.done [#allocation3], 128
    $region37: #{mlp_forward.1} parent=1 // pred_fallthru
      _
    %754 = vsyncpa [#allocation3], 1

</llo_original>
